<compile_context>
chip_gen: v5e
topology: v5e:2x2
jax: 0.10.0
libtpu: 0.0.40
codegen_flags: <defaults>
</compile_context>

<pallas_src>
import functools

import jax
import jax.numpy as jnp
from jax.experimental import pallas as pl
from jax.experimental.pallas import tpu as pltpu


def _round_up(x, m):
    return (x + m - 1) // m * m


# --------------------------------------------------------------------------
# Kernel 1: global BatchNorm1d batch statistics (reduction over batch tiles).
# Outputs double as accumulators: sum -> mean, sum(x^2) -> rsqrt(var + eps).
# --------------------------------------------------------------------------
def _bn_stats_kernel(x_ref, mean_ref, rstd_ref, *, n_rows, eps):
    @pl.when(pl.program_id(0) == 0)
    def _init():
        mean_ref[...] = jnp.zeros_like(mean_ref)
        rstd_ref[...] = jnp.zeros_like(rstd_ref)

    x = x_ref[...].astype(jnp.float32)
    mean_ref[...] += jnp.sum(x, axis=0, keepdims=True)       # running sum
    rstd_ref[...] += jnp.sum(x * x, axis=0, keepdims=True)   # running sum of squares

    @pl.when(pl.program_id(0) == pl.num_programs(0) - 1)
    def _finalize():
        inv_n = jnp.float32(1.0 / n_rows)
        mean = mean_ref[...] * inv_n
        var = rstd_ref[...] * inv_n - mean * mean             # fused one-pass variance
        mean_ref[...] = mean
        rstd_ref[...] = jax.lax.rsqrt(var + jnp.float32(eps))


def _bn_batch_stats(x_padded, n_rows, tile_rows, eps):
    pb, d_in = x_padded.shape
    kernel = functools.partial(_bn_stats_kernel, n_rows=n_rows, eps=eps)
    mean, rstd = pl.pallas_call(
        kernel,
        out_shape=(jax.ShapeDtypeStruct((1, d_in), jnp.float32),
                   jax.ShapeDtypeStruct((1, d_in), jnp.float32)),
        grid=(pb // tile_rows,),
        in_specs=[pl.BlockSpec((tile_rows, d_in), lambda i: (i, 0))],
        out_specs=(pl.BlockSpec((1, d_in), lambda i: (0, 0)),
                   pl.BlockSpec((1, d_in), lambda i: (0, 0))),
        compiler_params=pltpu.CompilerParams(
            dimension_semantics=("arbitrary",)),
    )(x_padded)
    return mean, rstd


# --------------------------------------------------------------------------
# Kernel 2: fused (BN-scale/shift) -> Linear -> ReLU -> Linear -> ReLU
#           -> Linear -> Softmax, tiled over the batch.
# --------------------------------------------------------------------------
def _mlp_kernel(x_ref, scale_ref, shift_ref,
                w1_ref, b1_ref, w2_ref, b2_ref, w3_ref, b3_ref,
                o_ref):
    x = x_ref[...].astype(jnp.float32)

    # BatchNorm1d folded into a single affine (global batch stats).
    xn = x * scale_ref[...] + shift_ref[...]

    # Linear(input_dim, hidden) + ReLU.  f32 MXU operands to hold 1e-5 tol;
    # cast xn/h1/h2 and weights to bf16 on v6e/v7x if tolerance allows.
    h1 = jnp.dot(xn, w1_ref[...], preferred_element_type=jnp.float32) + b1_ref[...]
    h1 = jnp.maximum(h1, 0.0)

    # Linear(hidden, hidden) + ReLU
    h2 = jnp.dot(h1, w2_ref[...], preferred_element_type=jnp.float32) + b2_ref[...]
    h2 = jnp.maximum(h2, 0.0)

    # Linear(hidden, padded target) — padded columns carry a -1e30 bias.
    logits = jnp.dot(h2, w3_ref[...], preferred_element_type=jnp.float32) + b3_ref[...]

    # Numerically stable softmax; padded columns contribute exp(.) == 0.
    m = jnp.max(logits, axis=-1, keepdims=True)
    e = jnp.exp(logits - m)
    denom = jnp.sum(e, axis=-1, keepdims=True)
    o_ref[...] = (e * pl.reciprocal(denom, approx=False)).astype(o_ref.dtype)


def neural_classification_forward(x, params, *, block_rows=256, eps=1e-5):
    """x: (batch, input_dim) float32. params: dict of weights (see init_params)."""
    batch, d_in = x.shape
    hidden = params["w1"].shape[1]
    target = params["w3"].shape[1]

    # ----- batch tiling: f32 sublane multiple of 8, conservative VMEM budget.
    tb = min(block_rows, _round_up(batch, 8))
    pb = _round_up(batch, tb)
    if pb != batch:
        x_p = jnp.zeros((pb, d_in), x.dtype).at[:batch].set(x)   # zero rows: exact stats
    else:
        x_p = x

    # ----- global BatchNorm1d statistics, folded into scale/shift.
    mean, rstd = _bn_batch_stats(x_p, batch, tb, eps)
    scale = params["gamma"] * rstd
    shift = params["beta"] - mean * scale

    # ----- lane-dense logits/output: pad last dim to a multiple of 128.
    n_pad = _round_up(target, 128)
    w3p = jnp.zeros((hidden, n_pad), jnp.float32).at[:, :target].set(params["w3"])
    b3p = jnp.full((1, n_pad), -1e30, jnp.float32).at[:, :target].set(params["b3"])

    resident = lambda shape: pl.BlockSpec(shape, lambda i: (0, 0))  # DMA'd once

    flops = 2 * pb * (d_in * hidden + hidden * hidden + hidden * n_pad)
    bytes_accessed = 4 * (x_p.size + pb * n_pad
                          + params["w1"].size + params["w2"].size + w3p.size
                          + 2 * d_in + 2 * hidden + n_pad)
    cost = pl.CostEstimate(flops=flops,
                           transcendentals=pb * n_pad,
                           bytes_accessed=bytes_accessed)

    out = pl.pallas_call(
        _mlp_kernel,
        out_shape=jax.ShapeDtypeStruct((pb, n_pad), jnp.float32),
        grid=(pb // tb,),
        in_specs=[
            pl.BlockSpec((tb, d_in), lambda i: (i, 0)),   # x: streamed per batch tile
            resident((1, d_in)),                          # BN scale
            resident((1, d_in)),                          # BN shift
            resident((d_in, hidden)),                     # w1
            resident((1, hidden)),                        # b1
            resident((hidden, hidden)),                   # w2
            resident((1, hidden)),                        # b2
            resident((hidden, n_pad)),                    # w3 (lane-padded)
            resident((1, n_pad)),                         # b3 (lane-padded)
        ],
        out_specs=pl.BlockSpec((tb, n_pad), lambda i: (i, 0)),
        compiler_params=pltpu.CompilerParams(
            dimension_semantics=("parallel",)),           # megacore / v7x 2-TC sharding
        cost_estimate=cost,
    )(x_p, scale, shift,
      params["w1"], params["b1"], params["w2"], params["b2"], w3p, b3p)

    return out[:batch, :target]


# --------------------------------------------------------------------------
# Parameter init (matches PyTorch module shapes; Linear weights stored (in,out))
# --------------------------------------------------------------------------
def init_params(key, input_dim, hidden_dim, target_size):
    k1, k2, k3, k4, k5, k6 = jax.random.split(key, 6)
    s1 = 1.0 / jnp.sqrt(jnp.float32(input_dim))
    s2 = 1.0 / jnp.sqrt(jnp.float32(hidden_dim))
    return {
        "gamma": jnp.ones((1, input_dim), jnp.float32),   # BN weight
        "beta": jnp.zeros((1, input_dim), jnp.float32),   # BN bias
        "w1": jax.random.uniform(k1, (input_dim, hidden_dim), jnp.float32, -s1, s1),
        "b1": jax.random.uniform(k2, (1, hidden_dim), jnp.float32, -s1, s1),
        "w2": jax.random.uniform(k3, (hidden_dim, hidden_dim), jnp.float32, -s2, s2),
        "b2": jax.random.uniform(k4, (1, hidden_dim), jnp.float32, -s2, s2),
        "w3": jax.random.uniform(k5, (hidden_dim, target_size), jnp.float32, -s2, s2),
        "b3": jax.random.uniform(k6, (1, target_size), jnp.float32, -s2, s2),
    }


def _reference(x, p):
    mean = jnp.mean(x, axis=0, keepdims=True)
    var = jnp.mean((x - mean) ** 2, axis=0, keepdims=True)
    xn = (x - mean) / jnp.sqrt(var + 1e-5) * p["gamma"] + p["beta"]
    h1 = jnp.maximum(xn @ p["w1"] + p["b1"], 0.0)
    h2 = jnp.maximum(h1 @ p["w2"] + p["b2"], 0.0)
    logits = h2 @ p["w3"] + p["b3"]
    return jax.nn.softmax(logits, axis=-1)


if __name__ == "__main__":
    batch, input_dim, hidden_dim, target_size = 8, 32, 32, 8

    key = jax.random.PRNGKey(0)
    kx, kp, kx2 = jax.random.split(key, 3)
    x = jax.random.normal(kx, (batch, input_dim), jnp.float32)
    params = init_params(kp, input_dim, hidden_dim, target_size)

    # --- small single-tile case -------------------------------------------
    out = jax.block_until_ready(neural_classification_forward(x, params))
    ref = _reference(x, params)
    assert out.shape == (batch, target_size)
    assert jnp.allclose(out, ref, atol=1e-5, rtol=1e-4)
    assert jnp.allclose(jnp.sum(out, axis=-1), 1.0, atol=1e-5)

    # --- multi-tile case: exercises batch grid, zero-padding, global BN stats
    batch2 = 200
    x2 = jax.random.normal(kx2, (batch2, input_dim), jnp.float32)
    out2 = jax.block_until_ready(
        neural_classification_forward(x2, params, block_rows=64))
    ref2 = _reference(x2, params)
    assert out2.shape == (batch2, target_size)
    assert jnp.allclose(out2, ref2, atol=1e-5, rtol=1e-4)
    assert jnp.allclose(jnp.sum(out2, axis=-1), 1.0, atol=1e-5)

    print("KERNEL_OK")
</pallas_src>

<mosaic_0001>
module attributes {stable_mosaic.version = 11 : i64} {
  func.func @_bn_stats_kernel(%arg0: i32, %arg1: memref<8x32xf32, #tpu.memory_space<vmem>>, %arg2: memref<1x32xf32, #tpu.memory_space<vmem>>, %arg3: memref<1x32xf32, #tpu.memory_space<vmem>>) attributes {dimension_semantics = [#tpu.dimension_semantics<arbitrary>], iteration_bounds = array<i64: 1>, scalar_prefetch = 0 : i64, scratch_operands = 0 : i64, tpu.core_type = #tpu.core_type<tc>, window_params = [{transform_indices = @transform_0, window_bounds = array<i64: 8, 32>}, {pipeline_mode = #tpu.pipeline_mode<synchronous>, transform_indices = @transform_1, window_bounds = array<i64: 1, 32>}, {pipeline_mode = #tpu.pipeline_mode<synchronous>, transform_indices = @transform_2, window_bounds = array<i64: 1, 32>}]} {
    %c0_i32 = arith.constant 0 : i32
    %0 = arith.cmpi eq, %arg0, %c0_i32 : i32
    %1 = arith.extui %0 : i1 to i32
    %c0_i32_0 = arith.constant 0 : i32
    %2 = arith.cmpi ne, %1, %c0_i32_0 : i32
    scf.if %2 {
      %cst_13 = arith.constant 0.000000e+00 : f32
      %18 = vector.broadcast %cst_13 : f32 to vector<1x32xf32>
      %c0_14 = arith.constant 0 : index
      %c0_15 = arith.constant 0 : index
      %19 = vector.load %arg2[%c0_14, %c0_15] : memref<1x32xf32, #tpu.memory_space<vmem>>, vector<1x32xf32>
      tpu.vector_store %arg2[%c0_14, %c0_15], %18 {strides = array<i32>} : memref<1x32xf32, #tpu.memory_space<vmem>>, vector<1x32xf32>,
      %cst_16 = arith.constant 0.000000e+00 : f32
      %20 = vector.broadcast %cst_16 : f32 to vector<1x32xf32>
      %c0_17 = arith.constant 0 : index
      %c0_18 = arith.constant 0 : index
      %21 = vector.load %arg3[%c0_17, %c0_18] : memref<1x32xf32, #tpu.memory_space<vmem>>, vector<1x32xf32>
      tpu.vector_store %arg3[%c0_17, %c0_18], %20 {strides = array<i32>} : memref<1x32xf32, #tpu.memory_space<vmem>>, vector<1x32xf32>,
    } else {
    }
    %c0 = arith.constant 0 : index
    %c0_1 = arith.constant 0 : index
    %3 = vector.load %arg1[%c0, %c0_1] : memref<8x32xf32, #tpu.memory_space<vmem>>, vector<8x32xf32>
    %c0_2 = arith.constant 0 : index
    %c0_3 = arith.constant 0 : index
    %4 = vector.load %arg2[%c0_2, %c0_3] : memref<1x32xf32, #tpu.memory_space<vmem>>, vector<1x32xf32>
    %cst = arith.constant dense<0.000000e+00> : vector<32xf32>
    %5 = vector.multi_reduction <add>, %3, %cst [0] : vector<8x32xf32> to vector<32xf32>
    %6 = vector.shape_cast %5 : vector<32xf32> to vector<1x32xf32>
    %7 = arith.addf %4, %6 : vector<1x32xf32>
    %c0_4 = arith.constant 0 : index
    %c0_5 = arith.constant 0 : index
    %8 = vector.load %arg2[%c0_4, %c0_5] : memref<1x32xf32, #tpu.memory_space<vmem>>, vector<1x32xf32>
    tpu.vector_store %arg2[%c0_4, %c0_5], %7 {strides = array<i32>} : memref<1x32xf32, #tpu.memory_space<vmem>>, vector<1x32xf32>,
    %c0_6 = arith.constant 0 : index
    %c0_7 = arith.constant 0 : index
    %9 = vector.load %arg3[%c0_6, %c0_7] : memref<1x32xf32, #tpu.memory_space<vmem>>, vector<1x32xf32>
    %10 = arith.mulf %3, %3 : vector<8x32xf32>
    %cst_8 = arith.constant dense<0.000000e+00> : vector<32xf32>
    %11 = vector.multi_reduction <add>, %10, %cst_8 [0] : vector<8x32xf32> to vector<32xf32>
    %12 = vector.shape_cast %11 : vector<32xf32> to vector<1x32xf32>
    %13 = arith.addf %9, %12 : vector<1x32xf32>
    %c0_9 = arith.constant 0 : index
    %c0_10 = arith.constant 0 : index
    %14 = vector.load %arg3[%c0_9, %c0_10] : memref<1x32xf32, #tpu.memory_space<vmem>>, vector<1x32xf32>
    tpu.vector_store %arg3[%c0_9, %c0_10], %13 {strides = array<i32>} : memref<1x32xf32, #tpu.memory_space<vmem>>, vector<1x32xf32>,
    %c0_i32_11 = arith.constant 0 : i32
    %15 = arith.cmpi eq, %arg0, %c0_i32_11 : i32
    %16 = arith.extui %15 : i1 to i32
    %c0_i32_12 = arith.constant 0 : i32
    %17 = arith.cmpi ne, %16, %c0_i32_12 : i32
    scf.if %17 {
      %c0_13 = arith.constant 0 : index
      %c0_14 = arith.constant 0 : index
      %18 = vector.load %arg2[%c0_13, %c0_14] : memref<1x32xf32, #tpu.memory_space<vmem>>, vector<1x32xf32>
      %cst_15 = arith.constant 1.250000e-01 : f32
      %19 = vector.broadcast %cst_15 : f32 to vector<1x32xf32>
      %20 = arith.mulf %18, %19 : vector<1x32xf32>
      %c0_16 = arith.constant 0 : index
      %c0_17 = arith.constant 0 : index
      %21 = vector.load %arg3[%c0_16, %c0_17] : memref<1x32xf32, #tpu.memory_space<vmem>>, vector<1x32xf32>
      %cst_18 = arith.constant 1.250000e-01 : f32
      %22 = vector.broadcast %cst_18 : f32 to vector<1x32xf32>
      %23 = arith.mulf %21, %22 : vector<1x32xf32>
      %24 = arith.mulf %20, %20 : vector<1x32xf32>
      %25 = arith.subf %23, %24 : vector<1x32xf32>
      %c0_19 = arith.constant 0 : index
      %c0_20 = arith.constant 0 : index
      %26 = vector.load %arg2[%c0_19, %c0_20] : memref<1x32xf32, #tpu.memory_space<vmem>>, vector<1x32xf32>
      tpu.vector_store %arg2[%c0_19, %c0_20], %20 {strides = array<i32>} : memref<1x32xf32, #tpu.memory_space<vmem>>, vector<1x32xf32>,
      %cst_21 = arith.constant 9.99999974E-6 : f32
      %27 = vector.broadcast %cst_21 : f32 to vector<1x32xf32>
      %28 = arith.addf %25, %27 : vector<1x32xf32>
      %29 = math.rsqrt %28 : vector<1x32xf32>
      %c0_22 = arith.constant 0 : index
      %c0_23 = arith.constant 0 : index
      %30 = vector.load %arg3[%c0_22, %c0_23] : memref<1x32xf32, #tpu.memory_space<vmem>>, vector<1x32xf32>
      tpu.vector_store %arg3[%c0_22, %c0_23], %29 {strides = array<i32>} : memref<1x32xf32, #tpu.memory_space<vmem>>, vector<1x32xf32>,
    } else {
    }
    return
  }
  func.func @transform_0(%arg0: i32) -> (i32, i32) {
    %c0_i32 = arith.constant 0 : i32
    %c0_i32_0 = arith.constant 0 : i32
    return %arg0, %c0_i32 : i32, i32
  }
  func.func @transform_1(%arg0: i32) -> (i32, i32) {
    %c0_i32 = arith.constant 0 : i32
    %c0_i32_0 = arith.constant 0 : i32
    %c0_i32_1 = arith.constant 0 : i32
    return %c0_i32, %c0_i32_0 : i32, i32
  }
  func.func @transform_2(%arg0: i32) -> (i32, i32) {
    %c0_i32 = arith.constant 0 : i32
    %c0_i32_0 = arith.constant 0 : i32
    %c0_i32_1 = arith.constant 0 : i32
    return %c0_i32, %c0_i32_0 : i32, i32
  }
}

</mosaic_0001>

<llo_original>
// kernel: tpu_custom_call.1
$region0: #{tpu_custom_call.1}
  #allocation0 [shape = 'u32[]', space=smem, size = 0x4, offset = 0x4, fixed_abs, tag = 'smem constant byte address 0x4 - core index']
  #allocation1 [shape = 'u32[72,128]{1,0:T(1,128)}', space=vmem, size = 0x9000, scoped, tag = 'internal scratch']
  %s0 = inlined_call_operand.hbm [shape: f32[8,32], index: 0, kind: input, shape index: {}]
  %s1 = inlined_call_operand.hbm [shape: f32[1,32], index: 1, kind: output, shape index: {0}]
  %s2 = inlined_call_operand.hbm [shape: f32[1,32], index: 2, kind: output, shape index: {1}]
  %3 = xla_tuple %s1, %s2
  %s4 = sld [smem:[#allocation0]]
  $region34: #{tpu_custom_call.1} parent=0
    _
  %s6 = ssub.s32 1, %s4
  %s7 = scalar_select 0, %s6, %s4
  $region1: #{tpu_custom_call.1} parent=0
    #allocation2 [shape = 'u8[4096]{0}', space=vmem, size = 0x1000, scoped, tag = 'input window, operand 0, single buffered']
    #allocation3 [shape = 's32[1]{0}', space=sflag, size = 0x4, scoped, tag = 'scoped memory for tpu_custom_call.1']
    #allocation4 [shape = 's32[1]{0}', space=sflag, size = 0x4, scoped, tag = 'scoped memory for tpu_custom_call.1']
    #allocation5 [shape = 'u8[512]{0}', space=vmem, size = 0x400, scoped, tag = 'output window, operand 0, single buffered']
    #allocation6 [shape = 'u8[512]{0}', space=vmem, size = 0x400, scoped, tag = 'output window, operand 1, single buffered']
    #allocation7 [shape = 's32[1]{0}', space=sflag, size = 0x4, scoped, tag = 'scoped memory for tpu_custom_call.1']
    %8 = vsyncpa [#allocation3], 0
    %9 = vsyncpa [#allocation4], 0
    %10 = vsyncpa [#allocation7], 0
    // Predicated region
    $region2: #{tpu_custom_call.1} parent=1 // pred_check
      _
    $region3: #{tpu_custom_call.1} parent=1 // pred_check_branch
      %12 = sbr.rel (0) target = $region5
    $region4: #{tpu_custom_call.1} parent=1 // pred_region
      %14 = vsyncadd [#allocation3], 0
      %s16 = sshll.u32 %s0, 4
      %s17 = int_to_ptr.hbm [resolvable:$true] %s16
      %s18 = sshll.u32 [#allocation2], 4
      %s19 = int_to_ptr.vmem [resolvable:$true] %s18
      %21 = dma.hbm_to_vmem [thread:$0]  %s17, 128, %s19, [#allocation3]
    $region5: #{tpu_custom_call.1} parent=1 // pred_fallthru
      _
    // Predicated region
    $region6: #{tpu_custom_call.1} parent=1 // pred_check
      _
    $region7: #{tpu_custom_call.1} parent=1 // pred_check_branch
      %23 = sbr.rel (0) target = $region9
    $region8: #{tpu_custom_call.1} parent=1 // pred_region
      %25 = dma.done [#allocation3], 128
    $region9: #{tpu_custom_call.1} parent=1 // pred_fallthru
      _
    %p26 = scmp.eq.s32.totalorder 0, 0
    // Predicated region
    $region10: #{tpu_custom_call.1} parent=1 // pred_check
      %p27 = pneg %p26
    $region11: #{tpu_custom_call.1} parent=1 // pred_check_branch
      %29 = sbr.rel (%p27) target = $region13
    $region12: #{tpu_custom_call.1} parent=1 // pred_region
      %vm30 = vcmask 253952
      %31 = vst.msk [vmem:[#allocation5] sm:$0x1] %vm30, 0.0
      %32 = vst.msk [vmem:[#allocation6] sm:$0x1] %vm30, 0.0
    $region13: #{tpu_custom_call.1} parent=1 // pred_fallthru
      _
    %v33 = vld [vmem:[#allocation2] sm:$0xff]
    %v34 = vld [vmem:[#allocation5] sm:$0x1]
    %vm35 = vcmask 261120
    %v36 = vsel %vm35, %v33, 0.0
    %v37 = vrot.slane %v36, 4
    %v38 = vadd.f32 %v36, %v37
    %v39 = vrot.slane %v38, 2
    %v40 = vadd.f32 %v38, %v39
    %v41 = vrot.slane %v40, 1
    %v42 = vadd.f32 %v40, %v41
    %v43 = vadd.f32 %v34, %v42
    %vm44 = vcmask 253952
    %45 = vst.msk [vmem:[#allocation5] sm:$0x1] %vm44, %v43
    %v46 = vld [vmem:[#allocation6] sm:$0x1]
    %v47 = vmul.f32 %v33, %v33
    %v48 = vsel %vm35, %v47, 0.0
    %v49 = vrot.slane %v48, 4
    %v50 = vadd.f32 %v48, %v49
    %v51 = vrot.slane %v50, 2
    %v52 = vadd.f32 %v50, %v51
    %v53 = vrot.slane %v52, 1
    %v54 = vadd.f32 %v52, %v53
    %v55 = vadd.f32 %v46, %v54
    %56 = vst.msk [vmem:[#allocation6] sm:$0x1] %vm44, %v55
    // Predicated region
    $region14: #{tpu_custom_call.1} parent=1 // pred_check
      %p57 = pneg %p26
    $region15: #{tpu_custom_call.1} parent=1 // pred_check_branch
      %59 = sbr.rel (%p57) target = $region17
    $region16: #{tpu_custom_call.1} parent=1 // pred_region
      %v60 = vld [vmem:[#allocation5] sm:$0x1]
      %v61 = vmul.f32 %v60, 0.125
      %v62 = vld [vmem:[#allocation6] sm:$0x1]
      %v63 = vmul.f32 %v62, 0.125
      %v64 = vmul.f32 %v61, %v61
      %v65 = vsub.f32 %v63, %v64
      %66 = vst.msk [vmem:[#allocation5] sm:$0x1] %vm44, %v61
      %v67 = vadd.f32 %v65, 1e-05
      %v68 = vrsqrt.pop %v67
      %v69 = vmul.f32 %v68, %v67
      %v70 = vmul.f32 %v69, %v68
      %v71 = vmul.f32 0.5, %v70
      %v72 = vsub.f32 1.5, %v71
      %v73 = vmul.f32 %v68, %v72
      %vm74 = vweird.f32 %v67
      %vm75 = vweird.f32 %v68
      %vm76 = vmor %vm74, %vm75
      %v77 = vsel %vm76, %v68, %v73
      %78 = vst.msk [vmem:[#allocation6] sm:$0x1] %vm44, %v77
    $region17: #{tpu_custom_call.1} parent=1 // pred_fallthru
      _
    // Predicated region
    $region18: #{tpu_custom_call.1} parent=1 // pred_check
      _
    $region19: #{tpu_custom_call.1} parent=1 // pred_check_branch
      %80 = sbr.rel (0) target = $region21
    $region20: #{tpu_custom_call.1} parent=1 // pred_region
      %82 = vsyncadd [#allocation4], 0
      %s84 = sshll.u32 [#allocation5], 4
      %s85 = int_to_ptr.vmem [resolvable:$true] %s84
      %s86 = sshll.u32 %s1, 4
      %s87 = int_to_ptr.hbm [resolvable:$true] %s86
      %89 = dma.vmem_to_hbm [thread:$0]  %s85, 16, %s87, [#allocation4]
    $region21: #{tpu_custom_call.1} parent=1 // pred_fallthru
      _
    // Predicated region
    $region22: #{tpu_custom_call.1} parent=1 // pred_check
      _
    $region23: #{tpu_custom_call.1} parent=1 // pred_check_branch
      %91 = sbr.rel (0) target = $region25
    $region24: #{tpu_custom_call.1} parent=1 // pred_region
      %93 = vsyncadd [#allocation7], 0
      %s95 = sshll.u32 [#allocation6], 4
      %s96 = int_to_ptr.vmem [resolvable:$true] %s95
      %s97 = sshll.u32 %s2, 4
      %s98 = int_to_ptr.hbm [resolvable:$true] %s97
      %100 = dma.vmem_to_hbm [thread:$0]  %s96, 16, %s98, [#allocation7]
    $region25: #{tpu_custom_call.1} parent=1 // pred_fallthru
      _
    // Predicated region
    $region26: #{tpu_custom_call.1} parent=1 // pred_check
      _
    $region27: #{tpu_custom_call.1} parent=1 // pred_check_branch
      %102 = sbr.rel (0) target = $region29
    $region28: #{tpu_custom_call.1} parent=1 // pred_region
      %104 = dma.done [#allocation4], 16
    $region29: #{tpu_custom_call.1} parent=1 // pred_fallthru
      _
    // Predicated region
    $region30: #{tpu_custom_call.1} parent=1 // pred_check
      _
    $region31: #{tpu_custom_call.1} parent=1 // pred_check_branch
      %106 = sbr.rel (0) target = $region33
    $region32: #{tpu_custom_call.1} parent=1 // pred_region
      %108 = dma.done [#allocation7], 16
    $region33: #{tpu_custom_call.1} parent=1 // pred_fallthru
      _
    %109 = vsyncpa [#allocation3], 1
    %110 = vsyncpa [#allocation4], 1
    %111 = vsyncpa [#allocation7], 1

</llo_original>
